<compile_context>
chip_gen: v7x
topology: tpu7x:2x2x1
jax: 0.10.0
libtpu: 0.0.40
codegen_flags: <defaults>
</compile_context>

<pallas_src>
import jax
import jax.numpy as jnp
import numpy as np
from jax.experimental import pallas as pl
from jax.experimental.pallas import tpu as pltpu


def _round_up(x, m):
    return ((x + m - 1) // m) * m


def _make_auc_kernel(ti, cj, n_chunks):
    def kernel(q_ref, r_ref, out_ref):
        # q_ref  : (ti, 1)           f32  positive-coded scores (sublane axis)
        # r_ref  : (n_chunks, 1, cj) f32  negative-coded scores, VMEM-resident
        # out_ref: (1, 8, cj)        f32  per-row-tile vector partial sums
        out_ref[...] = jnp.zeros_like(out_ref)
        q = q_ref[...]                                   # (ti, 1)

        def chunk(c, carry):
            r = r_ref[c]                                 # (1, cj) lane chunk
            # 2 compares + 2 selects per element (VALU); excluded/padded -> 0.0
            gt = q > r                                   # (ti, cj)
            eq = q == r
            score = jnp.where(gt, 1.0, jnp.where(eq, 0.5, 0.0))
            # Layout-preserving split of the sublane-tile axis -> the reduce is
            # pure vreg-wise adds (no cross-lane/cross-sublane XLU work).
            partial = score.reshape(ti // 8, 8, cj).sum(axis=0)   # (8, cj)
            out_ref[0] += partial
            return carry

        jax.lax.fori_loop(0, n_chunks, chunk, 0, unroll=(n_chunks <= 8))

    return kernel


def auc_pallas(output, target, *, tile_i=256, chunk_j=1024):
    """Pallas equivalent of AUC.forward(output, target) -> scalar AUC."""
    pred = jnp.asarray(output, jnp.float32).reshape(-1)
    targ = jnp.asarray(target, jnp.float32).reshape(-1)
    n = pred.shape[0]

    # Sentinel-coded operands (O(N), plain JAX). Non-binary labels are simply
    # excluded from both sides, matching the ==1.0 / ==0.0 filtering.
    q = jnp.where(targ == 1.0, pred, -jnp.inf)   # candidate positives (rows)
    r = jnp.where(targ == 0.0, pred, jnp.inf)    # candidate negatives (cols)

    # --- Row (sublane) tiling: ti multiple of 8, one grid axis over i. ---
    ti = min(tile_i, _round_up(n, 8))
    n_i = _round_up(n, ti)
    grid_i = n_i // ti
    # v7x has 2 TensorCores sharing the "parallel" axis: make the block count
    # even by halving ti (no extra padded work; harmless on v5e/v6e).
    if grid_i % 2 == 1 and ti % 16 == 0 and ti > 8:
        ti //= 2
        n_i = _round_up(n, ti)
        grid_i = n_i // ti

    # --- Column (lane) operand: whole row resident in VMEM, chunked in-kernel.
    n_j = _round_up(n, 128)
    cj = min(chunk_j, n_j)          # lane-dense chunk, multiple of 128
    n_j = _round_up(n_j, cj)
    n_chunks = n_j // cj

    # Padding uses the same sentinels -> padded pairs contribute 0.
    q_col = jnp.pad(q, (0, n_i - n), constant_values=-jnp.inf).reshape(n_i, 1)
    r_res = jnp.pad(r, (0, n_j - n),
                    constant_values=jnp.inf).reshape(n_chunks, 1, cj)

    cost = pl.CostEstimate(
        flops=5 * n_i * n_j,
        transcendentals=0,
        bytes_accessed=4 * (n_i + n_j + grid_i * 8 * cj),
    )

    partials = pl.pallas_call(
        _make_auc_kernel(ti, cj, n_chunks),
        out_shape=jax.ShapeDtypeStruct((grid_i, 8, cj), jnp.float32),
        grid_spec=pltpu.PrefetchScalarGridSpec(
            num_scalar_prefetch=0,
            grid=(grid_i,),
            in_specs=[
                pl.BlockSpec((ti, 1), lambda i: (i, 0)),            # q row tile
                pl.BlockSpec((n_chunks, 1, cj), lambda i: (0, 0, 0)),  # r resident
            ],
            out_specs=pl.BlockSpec((1, 8, cj), lambda i: (i, 0, 0)),
        ),
        compiler_params=pltpu.CompilerParams(
            dimension_semantics=("parallel",),
            vmem_limit_bytes=32 * 1024 * 1024),
        cost_estimate=cost,
    )(q_col, r_res)

    # Finalize outside the kernel (O(grid*cj) + O(N) work).
    num = jnp.sum(partials)
    n_pos = jnp.sum(targ == 1.0).astype(jnp.float32)
    n_neg = jnp.sum(targ == 0.0).astype(jnp.float32)
    denom = n_pos * n_neg
    # sklearn raises for single-class targets; we return NaN instead.
    return jnp.where(denom > 0, num / denom, jnp.nan)


def _auc_reference(output, target):
    """Pure numpy reference (same semantics as sklearn.roc_auc_score)."""
    p = np.asarray(output, np.float64).reshape(-1)
    t = np.asarray(target, np.float64).reshape(-1)
    pos = p[t == 1.0]
    neg = p[t == 0.0]
    cmp = (pos[:, None] > neg[None, :]).astype(np.float64) + \
          0.5 * (pos[:, None] == neg[None, :]).astype(np.float64)
    return cmp.sum() / (len(pos) * len(neg))


if __name__ == "__main__":
    key = jax.random.PRNGKey(0)
    k_pred, k_targ = jax.random.split(key)

    # Small shapes consistent with the module: a batch of prediction scores
    # and matching binary targets.
    output = jax.random.uniform(k_pred, (2, 128), dtype=jnp.float32)
    target = (jax.random.uniform(k_targ, (2, 128)) > 0.5).astype(jnp.float32)

    auc = auc_pallas(output, target)
    jax.block_until_ready(auc)

    ref = _auc_reference(np.asarray(output), np.asarray(target))
    assert np.isclose(float(auc), ref, atol=1e-5), (float(auc), ref)

    print("KERNEL_OK")
</pallas_src>

<mosaic_0001>
module attributes {stable_mosaic.version = 11 : i64} {
  func.func @kernel(%arg0: i32, %arg1: memref<128x1xf32, #tpu.memory_space<vmem>>, %arg2: memref<1x1x256xf32, #tpu.memory_space<vmem>>, %arg3: memref<1x8x256xf32, #tpu.memory_space<vmem>>) attributes {dimension_semantics = [#tpu.dimension_semantics<parallel>], iteration_bounds = array<i64: 2>, scalar_prefetch = 0 : i64, scratch_operands = 0 : i64, tpu.core_type = #tpu.core_type<tc>, window_params = [{transform_indices = @transform_0, window_bounds = array<i64: 128, 1>}, {pipeline_mode = #tpu.pipeline_mode<synchronous>, transform_indices = @transform_1, window_bounds = array<i64: 1, 1, 256>}, {transform_indices = @transform_2, window_bounds = array<i64: 1, 8, 256>}]} {
    %cst = arith.constant 0.000000e+00 : f32
    %0 = vector.broadcast %cst : f32 to vector<1x8x256xf32>
    %c0 = arith.constant 0 : index
    %c0_0 = arith.constant 0 : index
    %c0_1 = arith.constant 0 : index
    %1 = vector.load %arg3[%c0, %c0_0, %c0_1] : memref<1x8x256xf32, #tpu.memory_space<vmem>>, vector<1x8x256xf32>
    tpu.vector_store %arg3[%c0, %c0_0, %c0_1], %0 {strides = array<i32>} : memref<1x8x256xf32, #tpu.memory_space<vmem>>, vector<1x8x256xf32>,
    %c0_2 = arith.constant 0 : index
    %c0_3 = arith.constant 0 : index
    %2 = vector.load %arg1[%c0_2, %c0_3] : memref<128x1xf32, #tpu.memory_space<vmem>>, vector<128x1xf32>
    %c0_i32 = arith.constant 0 : i32
    %3 = arith.index_cast %c0_i32 : i32 to index
    %c0_4 = arith.constant 0 : index
    %c0_5 = arith.constant 0 : index
    %4 = vector.load %arg2[%3, %c0_4, %c0_5] : memref<1x1x256xf32, #tpu.memory_space<vmem>>, vector<1x1x256xf32>
    %5 = vector.shape_cast %4 : vector<1x1x256xf32> to vector<1x256xf32>
    %6 = vector.broadcast %2 : vector<128x1xf32> to vector<128x256xf32>
    %7 = vector.broadcast %5 : vector<1x256xf32> to vector<128x256xf32>
    %8 = arith.cmpf ogt, %6, %7 : vector<128x256xf32>
    %9 = vector.broadcast %2 : vector<128x1xf32> to vector<128x256xf32>
    %10 = vector.broadcast %5 : vector<1x256xf32> to vector<128x256xf32>
    %11 = arith.cmpf oeq, %9, %10 : vector<128x256xf32>
    %cst_6 = arith.constant 5.000000e-01 : f32
    %cst_7 = arith.constant 0.000000e+00 : f32
    %12 = vector.broadcast %cst_6 : f32 to vector<128x256xf32>
    %13 = vector.broadcast %cst_7 : f32 to vector<128x256xf32>
    %14 = arith.select %11, %12, %13 : vector<128x256xi1>, vector<128x256xf32>
    %cst_8 = arith.constant 1.000000e+00 : f32
    %15 = vector.broadcast %cst_8 : f32 to vector<128x256xf32>
    %16 = arith.select %8, %15, %14 : vector<128x256xi1>, vector<128x256xf32>
    %17 = vector.shape_cast %16 : vector<128x256xf32> to vector<16x8x256xf32>
    %cst_9 = arith.constant dense<0.000000e+00> : vector<8x256xf32>
    %18 = vector.multi_reduction <add>, %17, %cst_9 [0] : vector<16x8x256xf32> to vector<8x256xf32>
    %c0_10 = arith.constant 0 : index
    %c0_11 = arith.constant 0 : index
    %c0_12 = arith.constant 0 : index
    %19 = vector.load %arg3[%c0_10, %c0_11, %c0_12] : memref<1x8x256xf32, #tpu.memory_space<vmem>>, vector<1x8x256xf32>
    %20 = vector.shape_cast %19 : vector<1x8x256xf32> to vector<8x256xf32>
    %21 = arith.addf %20, %18 : vector<8x256xf32>
    %c0_13 = arith.constant 0 : index
    %c0_14 = arith.constant 0 : index
    %c0_15 = arith.constant 0 : index
    %22 = vector.load %arg3[%c0_13, %c0_14, %c0_15] : memref<1x8x256xf32, #tpu.memory_space<vmem>>, vector<1x8x256xf32>
    %23 = vector.shape_cast %22 : vector<1x8x256xf32> to vector<8x256xf32>
    %24 = vector.shape_cast %21 : vector<8x256xf32> to vector<1x8x256xf32>
    tpu.vector_store %arg3[%c0_13, %c0_14, %c0_15], %24 {strides = array<i32>} : memref<1x8x256xf32, #tpu.memory_space<vmem>>, vector<1x8x256xf32>,
    %c1_i32 = arith.constant 1 : i32
    return
  }
  func.func @transform_0(%arg0: i32) -> (i32, i32) {
    %c0_i32 = arith.constant 0 : i32
    %c0_i32_0 = arith.constant 0 : i32
    return %arg0, %c0_i32 : i32, i32
  }
  func.func @transform_1(%arg0: i32) -> (i32, i32, i32) {
    %c0_i32 = arith.constant 0 : i32
    %c0_i32_0 = arith.constant 0 : i32
    %c0_i32_1 = arith.constant 0 : i32
    %c0_i32_2 = arith.constant 0 : i32
    return %c0_i32, %c0_i32_0, %c0_i32_1 : i32, i32, i32
  }
  func.func @transform_2(%arg0: i32) -> (i32, i32, i32) {
    %c0_i32 = arith.constant 0 : i32
    %c0_i32_0 = arith.constant 0 : i32
    %c0_i32_1 = arith.constant 0 : i32
    return %arg0, %c0_i32, %c0_i32_0 : i32, i32, i32
  }
}

</mosaic_0001>

<llo_original>
// kernel: tpu_custom_call.1
$region0: #{tpu_custom_call.1}
  #allocation0 [shape = 'u32[]', space=smem, size = 0x4, offset = 0x4, fixed_abs, tag = 'smem constant byte address 0x4 - core index']
  #allocation1 [shape = 'u32[144,128]{1,0:T(1,128)}', space=vmem, size = 0x12000, scoped, tag = 'internal scratch']
  %s0 = inlined_call_operand.vmem [shape: f32[256,1], index: 0, kind: input, shape index: {}]
  %s1 = inlined_call_operand.vmem [shape: f32[1,1,256], index: 1, kind: input, shape index: {}]
  %s2 = inlined_call_operand.hbm [shape: f32[2,8,256], index: 2, kind: output, shape index: {}]
  %s3 = sld [smem:[#allocation0]]
  $region41: #{tpu_custom_call.1} parent=0
    _
  %s5 = ssub.s32 1, %s3
  %s6 = scalar_select 0, %s5, %s3
  $region1: #{tpu_custom_call.1} parent=0
    #allocation2 [shape = 'u8[16384]{0}', space=vmem, size = 0x4000, scoped, tag = 'output window, operand 0']
    #allocation3 [shape = 's32[2]{0}', space=sflag, size = 0x8, scoped, tag = 'scoped memory for tpu_custom_call.1']
    %7 = vsyncpa [#allocation3], 0
    %s8 = scalar_lea.sflag [#allocation3], 1
    %9 = vsyncpa %s8, 0
    loop: start=0, step=1, limit=4
    $region2: #{tpu_custom_call.1} parent=1 // loop_pre_header
      _
    $region3: #{tpu_custom_call.1} parent=1 // loop_header
      %s11 = sphi 0, %s15
      %p12 = scmp.ge.s32.totalorder %s11, 4
      %s21 = sphi 0, %s23
      %s24 = sphi 0, %s21
      %s25 = sphi 0, %s24
      %s41 = sphi 0, %s25
      %s45 = sphi 0, %s45
      %s47 = sphi 0, %s45
      %s48 = sphi 0, %s47
      %s62 = sphi 0, %s48
      %s68 = sphi 0, %s70
      %s71 = sphi 0, %s68
      %s72 = sphi 0, %s71
      %s88 = sphi 0, %s72
    $region4: #{tpu_custom_call.1} parent=1 // loop_header_branch
      %14 = sbr.rel (%p12) target = $region8
    $region5: #{tpu_custom_call.1} parent=1 // loop_body
      %s16 = ssub.s32 %s11, 1
      %s17 = ssub.s32 %s11, 2
      %s18 = sadd.s32 %s11, 1
      %s19 = ssub.s32 %s11, %s18
      %p20 = scmp.eq.s32.totalorder %s19, 0
      %s22 = sadd.s32 %s21, 1
      %s23 = scalar_select %p20, %s21, %s22
      %p26 = pneg %p20
      %p27 = scmp.eq.s32.totalorder %s11, 1
      %p28 = por %p26, %p27
      %p29 = scmp.ne.s32.totalorder %s21, %s24
      %p30 = scmp.eq.s32.totalorder %s11, 0
      %p31 = por %p29, %p30
      %p32 = scmp.ne.s32.totalorder %s21, %s24
      %p33 = scmp.eq.s32.totalorder %s16, 1
      %p34 = por %p32, %p33
      %p35 = scmp.ne.s32.totalorder %s24, %s25
      %p36 = scmp.eq.s32.totalorder %s16, 0
      %p37 = por %p35, %p36
      %p38 = scmp.ne.s32.totalorder %s24, %s25
      %p39 = scmp.eq.s32.totalorder %s17, 1
      %p40 = por %p38, %p39
      %p42 = scmp.ne.s32.totalorder %s25, %s41
      %p43 = scmp.eq.s32.totalorder %s17, 0
      %p44 = por %p42, %p43
      %s46 = sadd.s32 %s45, 1
      %p49 = scmp.eq.s32.totalorder %s11, 1
      %p50 = scmp.ne.s32.totalorder %s45, %s47
      %p51 = scmp.eq.s32.totalorder %s11, 0
      %p52 = por %p50, %p51
      %p53 = scmp.ne.s32.totalorder %s45, %s47
      %p54 = scmp.eq.s32.totalorder %s16, 1
      %p55 = por %p53, %p54
      %p56 = scmp.ne.s32.totalorder %s47, %s48
      %p57 = scmp.eq.s32.totalorder %s16, 0
      %p58 = por %p56, %p57
      %p59 = scmp.ne.s32.totalorder %s47, %s48
      %p60 = scmp.eq.s32.totalorder %s17, 1
      %p61 = por %p59, %p60
      %p63 = scmp.ne.s32.totalorder %s48, %s62
      %p64 = scmp.eq.s32.totalorder %s17, 0
      %p65 = por %p63, %p64
      %s66 = ssub.s32 %s11, %s18
      %p67 = scmp.eq.s32.totalorder %s66, 0
      %s69 = sadd.s32 %s68, 1
      %s70 = scalar_select %p67, %s68, %s69
      %p73 = pneg %p67
      %p74 = scmp.eq.s32.totalorder %s11, 1
      %p75 = por %p73, %p74
      %p76 = scmp.ne.s32.totalorder %s68, %s71
      %p77 = scmp.eq.s32.totalorder %s11, 0
      %p78 = por %p76, %p77
      %p79 = scmp.ne.s32.totalorder %s68, %s71
      %p80 = scmp.eq.s32.totalorder %s16, 1
      %p81 = por %p79, %p80
      %p82 = scmp.ne.s32.totalorder %s71, %s72
      %p83 = scmp.eq.s32.totalorder %s16, 0
      %p84 = por %p82, %p83
      %p85 = scmp.ne.s32.totalorder %s71, %s72
      %p86 = scmp.eq.s32.totalorder %s17, 1
      %p87 = por %p85, %p86
      %p89 = scmp.ne.s32.totalorder %s72, %s88
      %p90 = scmp.eq.s32.totalorder %s17, 0
      %p91 = por %p89, %p90
      %p92 = scmp.le.s32.totalorder 1, %s11
      %p93 = scmp.lt.s32.totalorder %s11, 3
      %p94 = pnand %p92, %p93
      %p95 = pneg %p94
      // Predicated region
      $region9: #{tpu_custom_call.1} parent=5 // pred_check
        _
      $region10: #{tpu_custom_call.1} parent=5 // pred_check_branch
        %97 = sbr.rel (%p94) target = $region12
      $region11: #{tpu_custom_call.1} parent=5 // pred_region
        %s98 = ssub.s32 %s11, 1
        // Predicated region
        $region13: #{tpu_custom_call.1} parent=11 // pred_check
          %p99 = pneg %p58
        $region14: #{tpu_custom_call.1} parent=11 // pred_check_branch
          %101 = sbr.rel (%p99) target = $region16
        $region15: #{tpu_custom_call.1} parent=11 // pred_region
          _
        $region16: #{tpu_custom_call.1} parent=11 // pred_fallthru
          _
      $region12: #{tpu_custom_call.1} parent=5 // pred_fallthru
        _
      %p102 = scmp.lt.s32.totalorder %s11, 2
      // Predicated region
      $region17: #{tpu_custom_call.1} parent=5 // pred_check
        %p103 = pneg %p102
      $region18: #{tpu_custom_call.1} parent=5 // pred_check_branch
        %105 = sbr.rel (%p103) target = $region20
      $region19: #{tpu_custom_call.1} parent=5 // pred_region
        // Predicated region
        $region21: #{tpu_custom_call.1} parent=19 // pred_check
          %p106 = pneg %p31
        $region22: #{tpu_custom_call.1} parent=19 // pred_check_branch
          %108 = sbr.rel (%p106) target = $region24
        $region23: #{tpu_custom_call.1} parent=19 // pred_region
          %s109 = smul.u32 16, %s11
          %p110 = scmp.lt.s32.totalorder %s109, 31
          %s111 = scalar_select %p110, %s109, 31
          %s112 = smul.addr %s111, 8
          %s113 = scalar_lea.vmem %s0, %s112
          %s114 = smul.u32 16, %s11
        $region24: #{tpu_custom_call.1} parent=19 // pred_fallthru
          _
      $region20: #{tpu_custom_call.1} parent=5 // pred_fallthru
        _
      %p115 = scmp.le.s32.totalorder 1, %s11
      %p116 = scmp.lt.s32.totalorder %s11, 3
      %p117 = pnand %p115, %p116
      %p118 = pneg %p117
      // Predicated region
      $region25: #{tpu_custom_call.1} parent=5 // pred_check
        _
      $region26: #{tpu_custom_call.1} parent=5 // pred_check_branch
        %120 = sbr.rel (%p117) target = $region28
      $region27: #{tpu_custom_call.1} parent=5 // pred_region
        %s121 = ssub.s32 %s11, 1
        %s122 = smul.u32 16, %s16
        %p123 = scmp.lt.s32.totalorder %s122, 31
        %s124 = scalar_select %p123, %s122, 31
        %s125 = smul.addr %s124, 8
        %s126 = scalar_lea.vmem %s0, %s125
        %p127 = pneg %p37
        %p128 = pneg %p34
        %p129 = pneg %p58
        %p130 = pneg %p55
        %p131 = pneg %p84
        %p132 = pneg %p81
        %s133 = sand.u32 %s71, 1
        %s134 = scalar_lea.sflag [#allocation3], %s133
        %s135 = sand.u32 %s71, 1
        %s136 = smul.addr %s135, 16
        %s137 = scalar_lea.vmem [#allocation2], %s136
        %s138 = smul.u32 16, %s16
        %p139 = scmp.lt.s32.totalorder %s138, 31
        %s140 = scalar_select %p139, %s138, 31
        %s141 = smul.addr %s140, 8
        %s142 = scalar_lea.vmem %s0, %s141
        %s143 = smul.u32 16, %s16
        %144 = vst [vmem:[%s137] sm:$0xff] 0.0
        %145 = vst [vmem:[%s137 + $0x8] sm:$0xff] 0.0
        %v146 = vld [vmem:[%s142] sm:$0xff]
        %v147 = vld [vmem:[%s142 + $0x8] sm:$0xff]
        %v148 = vld [vmem:[%s142 + $0x10] sm:$0xff]
        %v149 = vld [vmem:[%s142 + $0x18] sm:$0xff]
        %v150 = vld [vmem:[%s142 + $0x20] sm:$0xff]
        %v151 = vld [vmem:[%s142 + $0x28] sm:$0xff]
        %v152 = vld [vmem:[%s142 + $0x30] sm:$0xff]
        %v153 = vld [vmem:[%s142 + $0x38] sm:$0xff]
        %v154 = vld [vmem:[%s142 + $0x40] sm:$0xff]
        %v155 = vld [vmem:[%s142 + $0x48] sm:$0xff]
        %v156 = vld [vmem:[%s142 + $0x50] sm:$0xff]
        %v157 = vld [vmem:[%s142 + $0x58] sm:$0xff]
        %v158 = vld [vmem:[%s142 + $0x60] sm:$0xff]
        %v159 = vld [vmem:[%s142 + $0x68] sm:$0xff]
        %v160 = vld [vmem:[%s142 + $0x70] sm:$0xff]
        %v161 = vld [vmem:[%s142 + $0x78] sm:$0xff]
        %v162 = vld [vmem:[%s1] sm:$0x3]
        %164 = vset.pattern.permute.xlu0 0
        %165 = vperm.xlu0 %164, %v146
        %v166 = vpop.permute.xlu0 %165
        %169 = vset.pattern.permute.xlu0 0
        %170 = vperm.xlu0 %169, %v147
        %v171 = vpop.permute.xlu0 %170
        %174 = vset.pattern.permute.xlu0 0
        %175 = vperm.xlu0 %174, %v148
        %v176 = vpop.permute.xlu0 %175
        %179 = vset.pattern.permute.xlu0 0
        %180 = vperm.xlu0 %179, %v149
        %v181 = vpop.permute.xlu0 %180
        %184 = vset.pattern.permute.xlu0 0
        %185 = vperm.xlu0 %184, %v150
        %v186 = vpop.permute.xlu0 %185
        %189 = vset.pattern.permute.xlu0 0
        %190 = vperm.xlu0 %189, %v151
        %v191 = vpop.permute.xlu0 %190
        %194 = vset.pattern.permute.xlu0 0
        %195 = vperm.xlu0 %194, %v152
        %v196 = vpop.permute.xlu0 %195
        %199 = vset.pattern.permute.xlu0 0
        %200 = vperm.xlu0 %199, %v153
        %v201 = vpop.permute.xlu0 %200
        %204 = vset.pattern.permute.xlu0 0
        %205 = vperm.xlu0 %204, %v154
        %v206 = vpop.permute.xlu0 %205
        %209 = vset.pattern.permute.xlu0 0
        %210 = vperm.xlu0 %209, %v155
        %v211 = vpop.permute.xlu0 %210
        %214 = vset.pattern.permute.xlu0 0
        %215 = vperm.xlu0 %214, %v156
        %v216 = vpop.permute.xlu0 %215
        %219 = vset.pattern.permute.xlu0 0
        %220 = vperm.xlu0 %219, %v157
        %v221 = vpop.permute.xlu0 %220
        %224 = vset.pattern.permute.xlu0 0
        %225 = vperm.xlu0 %224, %v158
        %v226 = vpop.permute.xlu0 %225
        %229 = vset.pattern.permute.xlu0 0
        %230 = vperm.xlu0 %229, %v159
        %v231 = vpop.permute.xlu0 %230
        %234 = vset.pattern.permute.xlu0 0
        %235 = vperm.xlu0 %234, %v160
        %v236 = vpop.permute.xlu0 %235
        %239 = vset.pattern.permute.xlu0 0
        %240 = vperm.xlu0 %239, %v161
        %v241 = vpop.permute.xlu0 %240
        %v244 = vlaneseq
        %v245 = vshrl.u32 %v244, 7
        %v246 = vsub.s32 0, %v245
        %v247 = vrot.slane %v162, %v246
        %v248 = vlaneseq
        %v249 = vshrl.u32 %v248, 7
        %v250 = vsub.s32 1, %v249
        %v251 = vrot.slane %v162, %v250
        %vm254 = vcmp.gt.f32.partialorder %v166, %v247
        %vm255 = vcmp.gt.f32.partialorder %v166, %v251
        %vm256 = vcmp.gt.f32.partialorder %v171, %v247
        %vm257 = vcmp.gt.f32.partialorder %v171, %v251
        %vm258 = vcmp.gt.f32.partialorder %v176, %v247
        %vm259 = vcmp.gt.f32.partialorder %v176, %v251
        %vm260 = vcmp.gt.f32.partialorder %v181, %v247
        %vm261 = vcmp.gt.f32.partialorder %v181, %v251
        %vm262 = vcmp.gt.f32.partialorder %v186, %v247
        %vm263 = vcmp.gt.f32.partialorder %v186, %v251
        %vm264 = vcmp.gt.f32.partialorder %v191, %v247
        %vm265 = vcmp.gt.f32.partialorder %v191, %v251
        %vm266 = vcmp.gt.f32.partialorder %v196, %v247
        %vm267 = vcmp.gt.f32.partialorder %v196, %v251
        %vm268 = vcmp.gt.f32.partialorder %v201, %v247
        %vm269 = vcmp.gt.f32.partialorder %v201, %v251
        %vm270 = vcmp.gt.f32.partialorder %v206, %v247
        %vm271 = vcmp.gt.f32.partialorder %v206, %v251
        %vm272 = vcmp.gt.f32.partialorder %v211, %v247
        %vm273 = vcmp.gt.f32.partialorder %v211, %v251
        %vm274 = vcmp.gt.f32.partialorder %v216, %v247
        %vm275 = vcmp.gt.f32.partialorder %v216, %v251
        %vm276 = vcmp.gt.f32.partialorder %v221, %v247
        %vm277 = vcmp.gt.f32.partialorder %v221, %v251
        %vm278 = vcmp.gt.f32.partialorder %v226, %v247
        %vm279 = vcmp.gt.f32.partialorder %v226, %v251
        %vm280 = vcmp.gt.f32.partialorder %v231, %v247
        %vm281 = vcmp.gt.f32.partialorder %v231, %v251
        %vm282 = vcmp.gt.f32.partialorder %v236, %v247
        %vm283 = vcmp.gt.f32.partialorder %v236, %v251
        %vm284 = vcmp.gt.f32.partialorder %v241, %v247
        %vm285 = vcmp.gt.f32.partialorder %v241, %v251
        %vm286 = vcmp.eq.f32.partialorder %v166, %v247
        %vm287 = vcmp.eq.f32.partialorder %v166, %v251
        %vm288 = vcmp.eq.f32.partialorder %v171, %v247
        %vm289 = vcmp.eq.f32.partialorder %v171, %v251
        %vm290 = vcmp.eq.f32.partialorder %v176, %v247
        %vm291 = vcmp.eq.f32.partialorder %v176, %v251
        %vm292 = vcmp.eq.f32.partialorder %v181, %v247
        %vm293 = vcmp.eq.f32.partialorder %v181, %v251
        %vm294 = vcmp.eq.f32.partialorder %v186, %v247
        %vm295 = vcmp.eq.f32.partialorder %v186, %v251
        %vm296 = vcmp.eq.f32.partialorder %v191, %v247
        %vm297 = vcmp.eq.f32.partialorder %v191, %v251
        %vm298 = vcmp.eq.f32.partialorder %v196, %v247
        %vm299 = vcmp.eq.f32.partialorder %v196, %v251
        %vm300 = vcmp.eq.f32.partialorder %v201, %v247
        %vm301 = vcmp.eq.f32.partialorder %v201, %v251
        %vm302 = vcmp.eq.f32.partialorder %v206, %v247
        %vm303 = vcmp.eq.f32.partialorder %v206, %v251
        %vm304 = vcmp.eq.f32.partialorder %v211, %v247
        %vm305 = vcmp.eq.f32.partialorder %v211, %v251
        %vm306 = vcmp.eq.f32.partialorder %v216, %v247
        %vm307 = vcmp.eq.f32.partialorder %v216, %v251
        %vm308 = vcmp.eq.f32.partialorder %v221, %v247
        %vm309 = vcmp.eq.f32.partialorder %v221, %v251
        %vm310 = vcmp.eq.f32.partialorder %v226, %v247
        %vm311 = vcmp.eq.f32.partialorder %v226, %v251
        %vm312 = vcmp.eq.f32.partialorder %v231, %v247
        %vm313 = vcmp.eq.f32.partialorder %v231, %v251
        %vm314 = vcmp.eq.f32.partialorder %v236, %v247
        %vm315 = vcmp.eq.f32.partialorder %v236, %v251
        %vm316 = vcmp.eq.f32.partialorder %v241, %v247
        %vm317 = vcmp.eq.f32.partialorder %v241, %v251
        %v318 = vsel %vm286, 0.5, 0.0
        %v319 = vsel %vm287, 0.5, 0.0
        %v320 = vsel %vm288, 0.5, 0.0
        %v321 = vsel %vm289, 0.5, 0.0
        %v322 = vsel %vm290, 0.5, 0.0
        %v323 = vsel %vm291, 0.5, 0.0
        %v324 = vsel %vm292, 0.5, 0.0
        %v325 = vsel %vm293, 0.5, 0.0
        %v326 = vsel %vm294, 0.5, 0.0
        %v327 = vsel %vm295, 0.5, 0.0
        %v328 = vsel %vm296, 0.5, 0.0
        %v329 = vsel %vm297, 0.5, 0.0
        %v330 = vsel %vm298, 0.5, 0.0
        %v331 = vsel %vm299, 0.5, 0.0
        %v332 = vsel %vm300, 0.5, 0.0
        %v333 = vsel %vm301, 0.5, 0.0
        %v334 = vsel %vm302, 0.5, 0.0
        %v335 = vsel %vm303, 0.5, 0.0
        %v336 = vsel %vm304, 0.5, 0.0
        %v337 = vsel %vm305, 0.5, 0.0
        %v338 = vsel %vm306, 0.5, 0.0
        %v339 = vsel %vm307, 0.5, 0.0
        %v340 = vsel %vm308, 0.5, 0.0
        %v341 = vsel %vm309, 0.5, 0.0
        %v342 = vsel %vm310, 0.5, 0.0
        %v343 = vsel %vm311, 0.5, 0.0
        %v344 = vsel %vm312, 0.5, 0.0
        %v345 = vsel %vm313, 0.5, 0.0
        %v346 = vsel %vm314, 0.5, 0.0
        %v347 = vsel %vm315, 0.5, 0.0
        %v348 = vsel %vm316, 0.5, 0.0
        %v349 = vsel %vm317, 0.5, 0.0
        %v350 = vsel %vm254, 1.0, %v318
        %v351 = vsel %vm255, 1.0, %v319
        %v352 = vsel %vm256, 1.0, %v320
        %v353 = vsel %vm257, 1.0, %v321
        %v354 = vsel %vm258, 1.0, %v322
        %v355 = vsel %vm259, 1.0, %v323
        %v356 = vsel %vm260, 1.0, %v324
        %v357 = vsel %vm261, 1.0, %v325
        %v358 = vsel %vm262, 1.0, %v326
        %v359 = vsel %vm263, 1.0, %v327
        %v360 = vsel %vm264, 1.0, %v328
        %v361 = vsel %vm265, 1.0, %v329
        %v362 = vsel %vm266, 1.0, %v330
        %v363 = vsel %vm267, 1.0, %v331
        %v364 = vsel %vm268, 1.0, %v332
        %v365 = vsel %vm269, 1.0, %v333
        %v366 = vsel %vm270, 1.0, %v334
        %v367 = vsel %vm271, 1.0, %v335
        %v368 = vsel %vm272, 1.0, %v336
        %v369 = vsel %vm273, 1.0, %v337
        %v370 = vsel %vm274, 1.0, %v338
        %v371 = vsel %vm275, 1.0, %v339
        %v372 = vsel %vm276, 1.0, %v340
        %v373 = vsel %vm277, 1.0, %v341
        %v374 = vsel %vm278, 1.0, %v342
        %v375 = vsel %vm279, 1.0, %v343
        %v376 = vsel %vm280, 1.0, %v344
        %v377 = vsel %vm281, 1.0, %v345
        %v378 = vsel %vm282, 1.0, %v346
        %v379 = vsel %vm283, 1.0, %v347
        %v380 = vsel %vm284, 1.0, %v348
        %v381 = vsel %vm285, 1.0, %v349
        %v382 = vadd.f32 %v350, %v352
        %v383 = vadd.f32 %v382, %v354
        %v384 = vadd.f32 %v383, %v356
        %v385 = vadd.f32 %v384, %v358
        %v386 = vadd.f32 %v385, %v360
        %v387 = vadd.f32 %v386, %v362
        %v388 = vadd.f32 %v387, %v364
        %v389 = vadd.f32 %v388, %v366
        %v390 = vadd.f32 %v389, %v368
        %v391 = vadd.f32 %v390, %v370
        %v392 = vadd.f32 %v391, %v372
        %v393 = vadd.f32 %v392, %v374
        %v394 = vadd.f32 %v393, %v376
        %v395 = vadd.f32 %v394, %v378
        %v396 = vadd.f32 %v395, %v380
        %v397 = vadd.f32 %v351, %v353
        %v398 = vadd.f32 %v397, %v355
        %v399 = vadd.f32 %v398, %v357
        %v400 = vadd.f32 %v399, %v359
        %v401 = vadd.f32 %v400, %v361
        %v402 = vadd.f32 %v401, %v363
        %v403 = vadd.f32 %v402, %v365
        %v404 = vadd.f32 %v403, %v367
        %v405 = vadd.f32 %v404, %v369
        %v406 = vadd.f32 %v405, %v371
        %v407 = vadd.f32 %v406, %v373
        %v408 = vadd.f32 %v407, %v375
        %v409 = vadd.f32 %v408, %v377
        %v410 = vadd.f32 %v409, %v379
        %v411 = vadd.f32 %v410, %v381
        %v412 = vld [vmem:[%s137] sm:$0xff]
        %v413 = vld [vmem:[%s137 + $0x8] sm:$0xff]
        %v414 = vadd.f32 %v412, %v396
        %v415 = vadd.f32 %v413, %v411
        %416 = vst [vmem:[%s137] sm:$0xff] %v414
        %417 = vst [vmem:[%s137 + $0x8] sm:$0xff] %v415
        %s418 = sand.u32 %s71, 1
        %s419 = scalar_lea.sflag [#allocation3], %s418
        %s420 = sand.u32 %s71, 1
        %s421 = smul.addr %s420, 16
        %s422 = scalar_lea.vmem [#allocation2], %s421
        // Predicated region
        $region29: #{tpu_custom_call.1} parent=27 // pred_check
          %p423 = pneg %p81
        $region30: #{tpu_custom_call.1} parent=27 // pred_check_branch
          %425 = sbr.rel (%p423) target = $region32
        $region31: #{tpu_custom_call.1} parent=27 // pred_region
          %s427 = ssub.s32 256, 256
          %428 = vsyncadd %s419, %s427
          %s429 = smul.addr %s16, 2
          %s430 = smul.addr %s429, 128
          %s431 = scalar_lea.hbm %s2, %s430
          %s433 = sshll.u32 %s422, 4
          %s434 = int_to_ptr.vmem [resolvable:$true] %s433
          %436 = dma.vmem_to_hbm [thread:$0]  %s434, 256, %s431, %s419
        $region32: #{tpu_custom_call.1} parent=27 // pred_fallthru
          _
      $region28: #{tpu_custom_call.1} parent=5 // pred_fallthru
        _
      %p437 = scmp.le.s32.totalorder 2, %s11
      // Predicated region
      $region33: #{tpu_custom_call.1} parent=5 // pred_check
        %p438 = pneg %p437
      $region34: #{tpu_custom_call.1} parent=5 // pred_check_branch
        %440 = sbr.rel (%p438) target = $region36
      $region35: #{tpu_custom_call.1} parent=5 // pred_region
        %s441 = ssub.s32 %s11, 2
        // Predicated region
        $region37: #{tpu_custom_call.1} parent=35 // pred_check
          %p442 = pneg %p87
        $region38: #{tpu_custom_call.1} parent=35 // pred_check_branch
          %444 = sbr.rel (%p442) target = $region40
        $region39: #{tpu_custom_call.1} parent=35 // pred_region
          %s445 = sand.u32 %s72, 1
          %s446 = scalar_lea.sflag [#allocation3], %s445
          %s447 = sand.u32 %s72, 1
          %s448 = smul.addr %s447, 16
          %s449 = scalar_lea.vmem [#allocation2], %s448
          %450 = dma.done %s446, 256
        $region40: #{tpu_custom_call.1} parent=35 // pred_fallthru
          _
      $region36: #{tpu_custom_call.1} parent=5 // pred_fallthru
        _
    $region6: #{tpu_custom_call.1} parent=1 // loop_footer
      %s15 = sadd.s32 1, %s11
    $region7: #{tpu_custom_call.1} parent=1 // loop_footer_branch
      %10 = sbr.rel target = $region3
    $region8: #{tpu_custom_call.1} parent=1 // loop_exit
      _
    %451 = vsyncpa [#allocation3], 1
    %s452 = scalar_lea.sflag [#allocation3], 1
    %453 = vsyncpa %s452, 1

</llo_original>
